<compile_context>
chip_gen: v5e
topology: v5e:2x2
jax: 0.10.0
libtpu: 0.0.40
codegen_flags: <defaults>
</compile_context>

<pallas_src>
import functools

import jax
import jax.numpy as jnp
from jax.experimental import pallas as pl
from jax.experimental.pallas import tpu as pltpu


# -----------------------------------------------------------------------------
# Kernels
# -----------------------------------------------------------------------------
def _frn_fused_kernel(x_ref, g_ref, b_ref, t_ref, o_ref, *, eps, inv_hw):
    """Single-pass FRN on a (1, TC, HW) block in native (N, C, HW) layout."""
    x = x_ref[0].astype(jnp.float32)                           # (TC, HW)
    nu2 = jnp.sum(x * x, axis=1, keepdims=True) * inv_hw       # (TC, 1) spatial mean of x^2
    s = g_ref[...] * jax.lax.rsqrt(nu2 + eps)                  # folded per-channel scale
    y = x * s + b_ref[...]
    o_ref[0] = jnp.maximum(y, t_ref[...]).astype(o_ref.dtype)  # learned-threshold max


def _frn_reduce_kernel(x_ref, nu2_ref, *, inv_hw):
    """Pass 1 (large HW): accumulate sum(x^2) over spatial tiles -> nu2 (N, C, 1)."""
    k = pl.program_id(2)

    @pl.when(k == 0)
    def _():
        nu2_ref[0] = jnp.zeros_like(nu2_ref[0])

    x = x_ref[0].astype(jnp.float32)                           # (TC, HW_T)
    nu2_ref[0] += jnp.sum(x * x, axis=1, keepdims=True)

    @pl.when(k == pl.num_programs(2) - 1)
    def _():
        nu2_ref[0] = nu2_ref[0] * inv_hw


def _frn_apply_kernel(x_ref, nu2_ref, g_ref, b_ref, t_ref, o_ref, *, eps):
    """Pass 2 (large HW): streaming normalize + affine + max over spatial tiles."""
    x = x_ref[0].astype(jnp.float32)                           # (TC, HW_T)
    s = g_ref[...] * jax.lax.rsqrt(nu2_ref[0] + eps)           # (TC, 1)
    y = x * s + b_ref[...]
    o_ref[0] = jnp.maximum(y, t_ref[...]).astype(o_ref.dtype)


# -----------------------------------------------------------------------------
# Tile selection helpers
# -----------------------------------------------------------------------------
def _c_tile_candidates(C):
    """Channel tiles: C itself, plus divisors of C that are multiples of 8 (sublane)."""
    cands = {C}
    d = 8
    while d < C:
        if C % d == 0:
            cands.add(d)
        d += 8
    return sorted(cands, reverse=True)


def _hw_tile_candidates(HW):
    """Spatial tiles: divisors of HW that are multiples of 128 (lane)."""
    cands = []
    d = 128
    while d < HW:
        if HW % d == 0:
            cands.append(d)
        d += 128
    return sorted(cands, reverse=True)


# -----------------------------------------------------------------------------
# Wrapper
# -----------------------------------------------------------------------------
def frn_forward(x_nchw, gamma, beta, tau, *, eps=1e-5,
                block_budget_bytes=4 * 1024 * 1024):
    """FRN forward.  x_nchw: (N, C, H, W); gamma/beta/tau: (1, C, 1, 1).

    Output dtype matches the input dtype (matches PyTorch).  block_budget_bytes
    bounds the per-block activation footprint so both paths stay double-buffered
    on every TPU generation (v5e / v6e / v7x).
    """
    N, C, H, W = x_nchw.shape
    HW = H * W
    dtype = x_nchw.dtype
    itemsize = jnp.dtype(dtype).itemsize

    # Native NCHW layout viewed as (N, C, HW): C on sublanes, HW on lanes.
    # Reshape of a contiguous array is free (no extra HBM pass).
    x = x_nchw.reshape(N, C, HW)
    g = gamma.reshape(C, 1).astype(jnp.float32)
    b = beta.reshape(C, 1).astype(jnp.float32)
    t = tau.reshape(C, 1).astype(jnp.float32)

    inv_hw = 1.0 / float(HW)
    c_cands = _c_tile_candidates(C)

    # ---------------- single fused pass (preferred) ----------------
    tc_fused = None
    for tc in c_cands:
        if tc * HW * itemsize <= block_budget_bytes:
            tc_fused = tc
            break

    if tc_fused is not None:
        tc = tc_fused
        blk_bytes = tc * HW * itemsize
        vmem_limit = int(2 * 2 * blk_bytes + 8 * 3 * tc * 4 + (2 << 20))
        vmem_limit = min(max(vmem_limit, 16 << 20), 100 << 20)

        cost = pl.CostEstimate(
            flops=5 * N * C * HW,
            transcendentals=N * C,
            bytes_accessed=2 * N * C * HW * itemsize + 3 * C * 4,
        )

        out = pl.pallas_call(
            functools.partial(_frn_fused_kernel, eps=eps, inv_hw=inv_hw),
            out_shape=jax.ShapeDtypeStruct((N, C, HW), dtype),
            grid=(N, C // tc),
            in_specs=[
                pl.BlockSpec((1, tc, HW), lambda n, c: (n, c, 0)),
                pl.BlockSpec((tc, 1), lambda n, c: (c, 0)),   # gamma
                pl.BlockSpec((tc, 1), lambda n, c: (c, 0)),   # beta
                pl.BlockSpec((tc, 1), lambda n, c: (c, 0)),   # tau
            ],
            out_specs=pl.BlockSpec((1, tc, HW), lambda n, c: (n, c, 0)),
            compiler_params=pltpu.CompilerParams(
                dimension_semantics=("parallel", "parallel"),
                vmem_limit_bytes=vmem_limit,
            ),
            cost_estimate=cost,
        )(x, g, b, t)
        return out.reshape(N, C, H, W)

    # ---------------- two-pass path for very large H*W ----------------
    tc = None
    for c in c_cands:
        if c * 128 * itemsize <= block_budget_bytes:
            tc = c
            break
    if tc is None:
        tc = c_cands[-1]

    hw_t = HW
    for h in _hw_tile_candidates(HW):
        if tc * h * itemsize <= block_budget_bytes:
            hw_t = h
            break
    # TODO(synk): if HW has no divisor that is a multiple of 128, hw_t falls back to
    # the full spatial extent (still correct, but may exceed the block budget).

    n_c = C // tc
    n_hw = HW // hw_t
    blk_bytes = tc * hw_t * itemsize
    vmem_limit = int(2 * 2 * blk_bytes + 8 * tc * 4 + 8 * 3 * tc * 4 + (2 << 20))
    vmem_limit = min(max(vmem_limit, 16 << 20), 100 << 20)

    # Pass 1: nu2 = mean(x^2) per (n, c).  Reduction (HW) axis innermost / "arbitrary";
    # the (1, tc, 1) output block is resident across it (accumulator pattern).
    nu2 = pl.pallas_call(
        functools.partial(_frn_reduce_kernel, inv_hw=inv_hw),
        out_shape=jax.ShapeDtypeStruct((N, C, 1), jnp.float32),
        grid=(N, n_c, n_hw),
        in_specs=[pl.BlockSpec((1, tc, hw_t), lambda n, c, k: (n, c, k))],
        out_specs=pl.BlockSpec((1, tc, 1), lambda n, c, k: (n, c, 0)),
        compiler_params=pltpu.CompilerParams(
            dimension_semantics=("parallel", "parallel", "arbitrary"),
            vmem_limit_bytes=vmem_limit,
        ),
    )(x)

    # Pass 2: streaming normalize + affine + max.
    out = pl.pallas_call(
        functools.partial(_frn_apply_kernel, eps=eps),
        out_shape=jax.ShapeDtypeStruct((N, C, HW), dtype),
        grid=(N, n_c, n_hw),
        in_specs=[
            pl.BlockSpec((1, tc, hw_t), lambda n, c, k: (n, c, k)),
            pl.BlockSpec((1, tc, 1), lambda n, c, k: (n, c, 0)),
            pl.BlockSpec((tc, 1), lambda n, c, k: (c, 0)),
            pl.BlockSpec((tc, 1), lambda n, c, k: (c, 0)),
            pl.BlockSpec((tc, 1), lambda n, c, k: (c, 0)),
        ],
        out_specs=pl.BlockSpec((1, tc, hw_t), lambda n, c, k: (n, c, k)),
        compiler_params=pltpu.CompilerParams(
            dimension_semantics=("parallel", "parallel", "parallel"),
            vmem_limit_bytes=vmem_limit,
        ),
    )(x, nu2, g, b, t)
    return out.reshape(N, C, H, W)


def frn_reference(x, gamma, beta, tau, eps):
    nu2 = jnp.mean(jnp.square(x.astype(jnp.float32)), axis=(2, 3), keepdims=True)
    xn = x.astype(jnp.float32) * jax.lax.rsqrt(nu2 + eps)
    return jnp.maximum(gamma * xn + beta, tau).astype(x.dtype)


if __name__ == "__main__":
    key = jax.random.PRNGKey(0)
    kx, kg, kb, kt, kx2 = jax.random.split(key, 5)

    eps = 1e-5

    # Config consistent with the module: batch=2, num_features=128, 16x16 spatial.
    N, C, H, W = 2, 128, 16, 16
    x = jax.random.normal(kx, (N, C, H, W), jnp.float32)
    # Randomize the (normally zero/one-initialized) params so affine + max are exercised.
    gamma = 1.0 + 0.1 * jax.random.normal(kg, (1, C, 1, 1), jnp.float32)
    beta = 0.1 * jax.random.normal(kb, (1, C, 1, 1), jnp.float32)
    tau = 0.1 * jax.random.normal(kt, (1, C, 1, 1), jnp.float32)

    fwd = jax.jit(functools.partial(frn_forward, eps=eps))
    out = jax.block_until_ready(fwd(x, gamma, beta, tau))
    ref = frn_reference(x, gamma, beta, tau, eps)
    assert out.shape == (N, C, H, W) and out.dtype == x.dtype
    err = float(jnp.max(jnp.abs(out - ref)))
    assert jnp.allclose(out, ref, rtol=1e-5, atol=1e-5), f"fused path max abs err = {err}"

    # Also exercise the two-pass (spatially tiled) path, as used for very large
    # H*W layers (e.g. 256x256 StarGAN stages), by forcing a tiny block budget.
    N2, C2 = 2, 64
    x2 = jax.random.normal(kx2, (N2, C2, H, W), jnp.float32)
    g2, b2, t2 = gamma[:, :C2], beta[:, :C2], tau[:, :C2]
    fwd_tiled = jax.jit(functools.partial(frn_forward, eps=eps, block_budget_bytes=4096))
    out2 = jax.block_until_ready(fwd_tiled(x2, g2, b2, t2))
    ref2 = frn_reference(x2, g2, b2, t2, eps)
    err2 = float(jnp.max(jnp.abs(out2 - ref2)))
    assert jnp.allclose(out2, ref2, rtol=1e-5, atol=1e-5), f"tiled path max abs err = {err2}"

    print("KERNEL_OK")
</pallas_src>

<mosaic_0001>
module attributes {stable_mosaic.version = 11 : i64} {
  func.func @_frn_fused_kernel(%arg0: i32, %arg1: i32, %arg2: memref<1x128x256xf32, #tpu.memory_space<vmem>>, %arg3: memref<128x1xf32, #tpu.memory_space<vmem>>, %arg4: memref<128x1xf32, #tpu.memory_space<vmem>>, %arg5: memref<128x1xf32, #tpu.memory_space<vmem>>, %arg6: memref<1x128x256xf32, #tpu.memory_space<vmem>>) attributes {dimension_semantics = [#tpu.dimension_semantics<parallel>, #tpu.dimension_semantics<parallel>], iteration_bounds = array<i64: 2, 1>, scalar_prefetch = 0 : i64, scratch_operands = 0 : i64, tpu.core_type = #tpu.core_type<tc>, window_params = [{transform_indices = @transform_0, window_bounds = array<i64: 1, 128, 256>}, {transform_indices = @transform_1, window_bounds = array<i64: 128, 1>}, {transform_indices = @transform_2, window_bounds = array<i64: 128, 1>}, {transform_indices = @transform_3, window_bounds = array<i64: 128, 1>}, {transform_indices = @transform_4, window_bounds = array<i64: 1, 128, 256>}]} {
    %c0 = arith.constant 0 : index
    %c0_0 = arith.constant 0 : index
    %c0_1 = arith.constant 0 : index
    %0 = vector.load %arg2[%c0, %c0_0, %c0_1] : memref<1x128x256xf32, #tpu.memory_space<vmem>>, vector<1x128x256xf32>
    %1 = vector.shape_cast %0 : vector<1x128x256xf32> to vector<128x256xf32>
    %2 = arith.mulf %1, %1 : vector<128x256xf32>
    %cst = arith.constant dense<0.000000e+00> : vector<128xf32>
    %3 = vector.multi_reduction <add>, %2, %cst [1] : vector<128x256xf32> to vector<128xf32>
    %4 = vector.shape_cast %3 : vector<128xf32> to vector<128x1xf32>
    %cst_2 = arith.constant 3.906250e-03 : f32
    %5 = vector.broadcast %cst_2 : f32 to vector<128x1xf32>
    %6 = arith.mulf %4, %5 : vector<128x1xf32>
    %c0_3 = arith.constant 0 : index
    %c0_4 = arith.constant 0 : index
    %7 = vector.load %arg3[%c0_3, %c0_4] : memref<128x1xf32, #tpu.memory_space<vmem>>, vector<128x1xf32>
    %cst_5 = arith.constant 9.99999974E-6 : f32
    %8 = vector.broadcast %cst_5 : f32 to vector<128x1xf32>
    %9 = arith.addf %6, %8 : vector<128x1xf32>
    %10 = math.rsqrt %9 : vector<128x1xf32>
    %11 = arith.mulf %7, %10 : vector<128x1xf32>
    %12 = vector.broadcast %11 : vector<128x1xf32> to vector<128x256xf32>
    %13 = arith.mulf %1, %12 : vector<128x256xf32>
    %c0_6 = arith.constant 0 : index
    %c0_7 = arith.constant 0 : index
    %14 = vector.load %arg4[%c0_6, %c0_7] : memref<128x1xf32, #tpu.memory_space<vmem>>, vector<128x1xf32>
    %15 = vector.broadcast %14 : vector<128x1xf32> to vector<128x256xf32>
    %16 = arith.addf %13, %15 : vector<128x256xf32>
    %c0_8 = arith.constant 0 : index
    %c0_9 = arith.constant 0 : index
    %17 = vector.load %arg5[%c0_8, %c0_9] : memref<128x1xf32, #tpu.memory_space<vmem>>, vector<128x1xf32>
    %18 = vector.broadcast %17 : vector<128x1xf32> to vector<128x256xf32>
    %19 = arith.maximumf %16, %18 : vector<128x256xf32>
    %c0_10 = arith.constant 0 : index
    %c0_11 = arith.constant 0 : index
    %c0_12 = arith.constant 0 : index
    %20 = vector.load %arg6[%c0_10, %c0_11, %c0_12] : memref<1x128x256xf32, #tpu.memory_space<vmem>>, vector<1x128x256xf32>
    %21 = vector.shape_cast %20 : vector<1x128x256xf32> to vector<128x256xf32>
    %22 = vector.shape_cast %19 : vector<128x256xf32> to vector<1x128x256xf32>
    tpu.vector_store %arg6[%c0_10, %c0_11, %c0_12], %22 {strides = array<i32>} : memref<1x128x256xf32, #tpu.memory_space<vmem>>, vector<1x128x256xf32>,
    return
  }
  func.func @transform_0(%arg0: i32, %arg1: i32) -> (i32, i32, i32) {
    %c0_i32 = arith.constant 0 : i32
    %c0_i32_0 = arith.constant 0 : i32
    return %arg0, %arg1, %c0_i32 : i32, i32, i32
  }
  func.func @transform_1(%arg0: i32, %arg1: i32) -> (i32, i32) {
    %c0_i32 = arith.constant 0 : i32
    %c0_i32_0 = arith.constant 0 : i32
    return %arg1, %c0_i32 : i32, i32
  }
  func.func @transform_2(%arg0: i32, %arg1: i32) -> (i32, i32) {
    %c0_i32 = arith.constant 0 : i32
    %c0_i32_0 = arith.constant 0 : i32
    return %arg1, %c0_i32 : i32, i32
  }
  func.func @transform_3(%arg0: i32, %arg1: i32) -> (i32, i32) {
    %c0_i32 = arith.constant 0 : i32
    %c0_i32_0 = arith.constant 0 : i32
    return %arg1, %c0_i32 : i32, i32
  }
  func.func @transform_4(%arg0: i32, %arg1: i32) -> (i32, i32, i32) {
    %c0_i32 = arith.constant 0 : i32
    %c0_i32_0 = arith.constant 0 : i32
    return %arg0, %arg1, %c0_i32 : i32, i32, i32
  }
}

</mosaic_0001>

<llo_original>
// kernel: frn_forward.1
$region0: #{frn_forward.1}
  #allocation0 [shape = 'u32[]', space=smem, size = 0x4, offset = 0x4, fixed_abs, tag = 'smem constant byte address 0x4 - core index']
  #allocation1 [shape = 'u32[72,128]{1,0:T(1,128)}', space=vmem, size = 0x9000, scoped, tag = 'internal scratch']
  %s0 = inlined_call_operand.vmem [shape: f32[2,128,256], index: 0, kind: input, shape index: {}]
  %s1 = inlined_call_operand.vmem [shape: f32[128,1], index: 1, kind: input, shape index: {}]
  %s2 = inlined_call_operand.vmem [shape: f32[128,1], index: 2, kind: input, shape index: {}]
  %s3 = inlined_call_operand.vmem [shape: f32[128,1], index: 3, kind: input, shape index: {}]
  %s4 = inlined_call_operand.vmem [shape: f32[2,128,256], index: 4, kind: output, shape index: {}]
  %s5 = sld [smem:[#allocation0]]
  $region49: #{frn_forward.1} parent=0
    _
  %s7 = ssub.s32 1, %s5
  %s8 = scalar_select 0, %s7, %s5
  loop: start=0, step=1, limit=4
  $region2: #{frn_forward.1} parent=0 // loop_pre_header
    _
  $region3: #{frn_forward.1} parent=0 // loop_header
    %s10 = sphi 0, %s14
    %p11 = scmp.ge.s32.totalorder %s10, 4
    %s17 = sphi 0, %s29
    %s18 = sphi 0, %s25
    %s19 = sphi 0, %s17
    %s20 = sphi 0, %s18
    %s21 = sphi 0, %s19
    %s22 = sphi 0, %s20
    %s34 = sphi 0, %s36
    %s37 = sphi 0, %s34
    %s38 = sphi 0, %s37
    %s54 = sphi 0, %s38
    %s60 = sphi 0, %s62
    %s63 = sphi 0, %s60
    %s64 = sphi 0, %s63
    %s80 = sphi 0, %s64
    %s86 = sphi 0, %s88
    %s89 = sphi 0, %s86
    %s90 = sphi 0, %s89
    %s106 = sphi 0, %s90
    %s112 = sphi 0, %s114
    %s115 = sphi 0, %s112
    %s116 = sphi 0, %s115
    %s132 = sphi 0, %s116
    %s140 = sphi 0, %s142
    %s143 = sphi 0, %s140
    %s144 = sphi 0, %s143
    %s160 = sphi 0, %s144
  $region4: #{frn_forward.1} parent=0 // loop_header_branch
    %13 = sbr.rel (%p11) target = $region8
  $region5: #{frn_forward.1} parent=0 // loop_body
    %s15 = ssub.s32 %s10, 1
    %s16 = ssub.s32 %s10, 2
    %s23 = sadd.s32 1, %s18
    %p24 = scmp.ge.s32.totalorder %s23, 1
    %s25 = scalar_select %p24, 0, %s23
    %s26 = sadd.s32 1, %s17
    %s27 = scalar_select %p24, %s26, %s17
    %p28 = scmp.ge.s32.totalorder %s27, 2
    %s29 = scalar_select %p28, 0, %s27
    %s30 = ssub.s32 %s17, %s29
    %s31 = ssub.s32 %s18, %s25
    %s32 = sor.u32 %s30, %s31
    %p33 = scmp.eq.s32.totalorder %s32, 0
    %s35 = sadd.s32 %s34, 1
    %s36 = scalar_select %p33, %s34, %s35
    %p39 = pneg %p33
    %p40 = scmp.eq.s32.totalorder %s10, 1
    %p41 = por %p39, %p40
    %p42 = scmp.ne.s32.totalorder %s34, %s37
    %p43 = scmp.eq.s32.totalorder %s10, 0
    %p44 = por %p42, %p43
    %p45 = scmp.ne.s32.totalorder %s34, %s37
    %p46 = scmp.eq.s32.totalorder %s15, 1
    %p47 = por %p45, %p46
    %p48 = scmp.ne.s32.totalorder %s37, %s38
    %p49 = scmp.eq.s32.totalorder %s15, 0
    %p50 = por %p48, %p49
    %p51 = scmp.ne.s32.totalorder %s37, %s38
    %p52 = scmp.eq.s32.totalorder %s16, 1
    %p53 = por %p51, %p52
    %p55 = scmp.ne.s32.totalorder %s38, %s54
    %p56 = scmp.eq.s32.totalorder %s16, 0
    %p57 = por %p55, %p56
    %s58 = ssub.s32 %s18, %s25
    %p59 = scmp.eq.s32.totalorder %s58, 0
    %s61 = sadd.s32 %s60, 1
    %s62 = scalar_select %p59, %s60, %s61
    %p65 = pneg %p59
    %p66 = scmp.eq.s32.totalorder %s10, 1
    %p67 = por %p65, %p66
    %p68 = scmp.ne.s32.totalorder %s60, %s63
    %p69 = scmp.eq.s32.totalorder %s10, 0
    %p70 = por %p68, %p69
    %p71 = scmp.ne.s32.totalorder %s60, %s63
    %p72 = scmp.eq.s32.totalorder %s15, 1
    %p73 = por %p71, %p72
    %p74 = scmp.ne.s32.totalorder %s63, %s64
    %p75 = scmp.eq.s32.totalorder %s15, 0
    %p76 = por %p74, %p75
    %p77 = scmp.ne.s32.totalorder %s63, %s64
    %p78 = scmp.eq.s32.totalorder %s16, 1
    %p79 = por %p77, %p78
    %p81 = scmp.ne.s32.totalorder %s64, %s80
    %p82 = scmp.eq.s32.totalorder %s16, 0
    %p83 = por %p81, %p82
    %s84 = ssub.s32 %s18, %s25
    %p85 = scmp.eq.s32.totalorder %s84, 0
    %s87 = sadd.s32 %s86, 1
    %s88 = scalar_select %p85, %s86, %s87
    %p91 = pneg %p85
    %p92 = scmp.eq.s32.totalorder %s10, 1
    %p93 = por %p91, %p92
    %p94 = scmp.ne.s32.totalorder %s86, %s89
    %p95 = scmp.eq.s32.totalorder %s10, 0
    %p96 = por %p94, %p95
    %p97 = scmp.ne.s32.totalorder %s86, %s89
    %p98 = scmp.eq.s32.totalorder %s15, 1
    %p99 = por %p97, %p98
    %p100 = scmp.ne.s32.totalorder %s89, %s90
    %p101 = scmp.eq.s32.totalorder %s15, 0
    %p102 = por %p100, %p101
    %p103 = scmp.ne.s32.totalorder %s89, %s90
    %p104 = scmp.eq.s32.totalorder %s16, 1
    %p105 = por %p103, %p104
    %p107 = scmp.ne.s32.totalorder %s90, %s106
    %p108 = scmp.eq.s32.totalorder %s16, 0
    %p109 = por %p107, %p108
    %s110 = ssub.s32 %s18, %s25
    %p111 = scmp.eq.s32.totalorder %s110, 0
    %s113 = sadd.s32 %s112, 1
    %s114 = scalar_select %p111, %s112, %s113
    %p117 = pneg %p111
    %p118 = scmp.eq.s32.totalorder %s10, 1
    %p119 = por %p117, %p118
    %p120 = scmp.ne.s32.totalorder %s112, %s115
    %p121 = scmp.eq.s32.totalorder %s10, 0
    %p122 = por %p120, %p121
    %p123 = scmp.ne.s32.totalorder %s112, %s115
    %p124 = scmp.eq.s32.totalorder %s15, 1
    %p125 = por %p123, %p124
    %p126 = scmp.ne.s32.totalorder %s115, %s116
    %p127 = scmp.eq.s32.totalorder %s15, 0
    %p128 = por %p126, %p127
    %p129 = scmp.ne.s32.totalorder %s115, %s116
    %p130 = scmp.eq.s32.totalorder %s16, 1
    %p131 = por %p129, %p130
    %p133 = scmp.ne.s32.totalorder %s116, %s132
    %p134 = scmp.eq.s32.totalorder %s16, 0
    %p135 = por %p133, %p134
    %s136 = ssub.s32 %s17, %s29
    %s137 = ssub.s32 %s18, %s25
    %s138 = sor.u32 %s136, %s137
    %p139 = scmp.eq.s32.totalorder %s138, 0
    %s141 = sadd.s32 %s140, 1
    %s142 = scalar_select %p139, %s140, %s141
    %p145 = pneg %p139
    %p146 = scmp.eq.s32.totalorder %s10, 1
    %p147 = por %p145, %p146
    %p148 = scmp.ne.s32.totalorder %s140, %s143
    %p149 = scmp.eq.s32.totalorder %s10, 0
    %p150 = por %p148, %p149
    %p151 = scmp.ne.s32.totalorder %s140, %s143
    %p152 = scmp.eq.s32.totalorder %s15, 1
    %p153 = por %p151, %p152
    %p154 = scmp.ne.s32.totalorder %s143, %s144
    %p155 = scmp.eq.s32.totalorder %s15, 0
    %p156 = por %p154, %p155
    %p157 = scmp.ne.s32.totalorder %s143, %s144
    %p158 = scmp.eq.s32.totalorder %s16, 1
    %p159 = por %p157, %p158
    %p161 = scmp.ne.s32.totalorder %s144, %s160
    %p162 = scmp.eq.s32.totalorder %s16, 0
    %p163 = por %p161, %p162
    %p164 = scmp.le.s32.totalorder 1, %s10
    %p165 = scmp.lt.s32.totalorder %s10, 3
    %p166 = pnand %p164, %p165
    %p167 = pneg %p166
    // Predicated region
    $region9: #{frn_forward.1} parent=5 // pred_check
      _
    $region10: #{frn_forward.1} parent=5 // pred_check_branch
      %169 = sbr.rel (%p166) target = $region12
    $region11: #{frn_forward.1} parent=5 // pred_region
      %s170 = ssub.s32 %s10, 1
      // Predicated region
      $region13: #{frn_forward.1} parent=11 // pred_check
        %p171 = pneg %p76
      $region14: #{frn_forward.1} parent=11 // pred_check_branch
        %173 = sbr.rel (%p171) target = $region16
      $region15: #{frn_forward.1} parent=11 // pred_region
        %s174 = smul.u32 16, %s20
        %p175 = scmp.lt.s32.totalorder %s174, 15
        %s176 = scalar_select %p175, %s174, 15
        %s177 = smul.addr %s176, 8
        %s178 = scalar_lea.vmem %s1, %s177
        %s179 = smul.u32 16, %s20
      $region16: #{frn_forward.1} parent=11 // pred_fallthru
        _
      // Predicated region
      $region17: #{frn_forward.1} parent=11 // pred_check
        %p180 = pneg %p102
      $region18: #{frn_forward.1} parent=11 // pred_check_branch
        %182 = sbr.rel (%p180) target = $region20
      $region19: #{frn_forward.1} parent=11 // pred_region
        %s183 = smul.u32 16, %s20
        %p184 = scmp.lt.s32.totalorder %s183, 15
        %s185 = scalar_select %p184, %s183, 15
        %s186 = smul.addr %s185, 8
        %s187 = scalar_lea.vmem %s2, %s186
        %s188 = smul.u32 16, %s20
      $region20: #{frn_forward.1} parent=11 // pred_fallthru
        _
      // Predicated region
      $region21: #{frn_forward.1} parent=11 // pred_check
        %p189 = pneg %p128
      $region22: #{frn_forward.1} parent=11 // pred_check_branch
        %191 = sbr.rel (%p189) target = $region24
      $region23: #{frn_forward.1} parent=11 // pred_region
        %s192 = smul.u32 16, %s20
        %p193 = scmp.lt.s32.totalorder %s192, 15
        %s194 = scalar_select %p193, %s192, 15
        %s195 = smul.addr %s194, 8
        %s196 = scalar_lea.vmem %s3, %s195
        %s197 = smul.u32 16, %s20
      $region24: #{frn_forward.1} parent=11 // pred_fallthru
        _
    $region12: #{frn_forward.1} parent=5 // pred_fallthru
      _
    %p198 = scmp.lt.s32.totalorder %s10, 2
    // Predicated region
    $region25: #{frn_forward.1} parent=5 // pred_check
      %p199 = pneg %p198
    $region26: #{frn_forward.1} parent=5 // pred_check_branch
      %201 = sbr.rel (%p199) target = $region28
    $region27: #{frn_forward.1} parent=5 // pred_region
      // Predicated region
      $region29: #{frn_forward.1} parent=27 // pred_check
        %p202 = pneg %p44
      $region30: #{frn_forward.1} parent=27 // pred_check_branch
        %204 = sbr.rel (%p202) target = $region32
      $region31: #{frn_forward.1} parent=27 // pred_region
        %s205 = smul.u32 16, %s18
        %p206 = scmp.lt.s32.totalorder %s17, 1
        %s207 = scalar_select %p206, %s17, 1
        %p208 = scmp.lt.s32.totalorder %s205, 15
        %s209 = scalar_select %p208, %s205, 15
        %s210 = smul.addr %s209, 2
        %s211 = smul.addr %s207, 32
        %s212 = sadd.s32 %s210, %s211
        %s213 = smul.addr %s212, 8
        %s214 = scalar_lea.vmem %s0, %s213
        %s215 = smul.u32 16, %s18
      $region32: #{frn_forward.1} parent=27 // pred_fallthru
        _
    $region28: #{frn_forward.1} parent=5 // pred_fallthru
      _
    %p216 = scmp.le.s32.totalorder 1, %s10
    %p217 = scmp.lt.s32.totalorder %s10, 3
    %p218 = pnand %p216, %p217
    %p219 = pneg %p218
    // Predicated region
    $region33: #{frn_forward.1} parent=5 // pred_check
      _
    $region34: #{frn_forward.1} parent=5 // pred_check_branch
      %221 = sbr.rel (%p218) target = $region36
    $region35: #{frn_forward.1} parent=5 // pred_region
      %s222 = ssub.s32 %s10, 1
      %s223 = smul.u32 16, %s20
      %p224 = scmp.lt.s32.totalorder %s19, 1
      %s225 = scalar_select %p224, %s19, 1
      %p226 = scmp.lt.s32.totalorder %s223, 15
      %s227 = scalar_select %p226, %s223, 15
      %s228 = smul.addr %s227, 2
      %s229 = smul.addr %s225, 32
      %s230 = sadd.s32 %s228, %s229
      %s231 = smul.addr %s230, 8
      %s232 = scalar_lea.vmem %s0, %s231
      %p233 = pneg %p50
      %p234 = pneg %p47
      %s235 = smul.u32 16, %s20
      %p236 = scmp.lt.s32.totalorder %s235, 15
      %s237 = scalar_select %p236, %s235, 15
      %s238 = smul.addr %s237, 8
      %s239 = scalar_lea.vmem %s1, %s238
      %p240 = pneg %p76
      %p241 = pneg %p73
      %s242 = smul.u32 16, %s20
      %p243 = scmp.lt.s32.totalorder %s242, 15
      %s244 = scalar_select %p243, %s242, 15
      %s245 = smul.addr %s244, 8
      %s246 = scalar_lea.vmem %s2, %s245
      %p247 = pneg %p102
      %p248 = pneg %p99
      %s249 = smul.u32 16, %s20
      %p250 = scmp.lt.s32.totalorder %s249, 15
      %s251 = scalar_select %p250, %s249, 15
      %s252 = smul.addr %s251, 8
      %s253 = scalar_lea.vmem %s3, %s252
      %p254 = pneg %p128
      %p255 = pneg %p125
      %p256 = pneg %p156
      %p257 = pneg %p153
      %s258 = smul.u32 16, %s20
      %p259 = scmp.lt.s32.totalorder %s19, 1
      %s260 = scalar_select %p259, %s19, 1
      %p261 = scmp.lt.s32.totalorder %s258, 15
      %s262 = scalar_select %p261, %s258, 15
      %s263 = smul.addr %s262, 2
      %s264 = smul.addr %s260, 32
      %s265 = sadd.s32 %s263, %s264
      %s266 = smul.addr %s265, 8
      %s267 = scalar_lea.vmem %s4, %s266
      %s268 = smul.u32 16, %s20
      %p269 = scmp.lt.s32.totalorder %s19, 1
      %s270 = scalar_select %p269, %s19, 1
      %p271 = scmp.lt.s32.totalorder %s268, 15
      %s272 = scalar_select %p271, %s268, 15
      %s273 = smul.addr %s272, 2
      %s274 = smul.addr %s270, 32
      %s275 = sadd.s32 %s273, %s274
      %s276 = smul.addr %s275, 8
      %s277 = scalar_lea.vmem %s0, %s276
      %s278 = smul.u32 16, %s20
      %s279 = smul.u32 16, %s20
      %p280 = scmp.lt.s32.totalorder %s279, 15
      %s281 = scalar_select %p280, %s279, 15
      %s282 = smul.addr %s281, 8
      %s283 = scalar_lea.vmem %s1, %s282
      %s284 = smul.u32 16, %s20
      %s285 = smul.u32 16, %s20
      %p286 = scmp.lt.s32.totalorder %s285, 15
      %s287 = scalar_select %p286, %s285, 15
      %s288 = smul.addr %s287, 8
      %s289 = scalar_lea.vmem %s2, %s288
      %s290 = smul.u32 16, %s20
      %s291 = smul.u32 16, %s20
      %p292 = scmp.lt.s32.totalorder %s291, 15
      %s293 = scalar_select %p292, %s291, 15
      %s294 = smul.addr %s293, 8
      %s295 = scalar_lea.vmem %s3, %s294
      %s296 = smul.u32 16, %s20
      %s297 = smul.u32 16, %s20
      %p298 = scmp.lt.s32.totalorder %s19, 1
      %s299 = scalar_select %p298, %s19, 1
      %p300 = scmp.lt.s32.totalorder %s297, 15
      %s301 = scalar_select %p300, %s297, 15
      %s302 = smul.addr %s301, 2
      %s303 = smul.addr %s299, 32
      %s304 = sadd.s32 %s302, %s303
      %s305 = smul.addr %s304, 8
      %s306 = scalar_lea.vmem %s4, %s305
      %s307 = smul.u32 16, %s20
      %v308 = vld [vmem:[%s277] sm:$0xff]
      %v309 = vld [vmem:[%s277 + $0x8] sm:$0xff]
      %v310 = vld [vmem:[%s277 + $0x10] sm:$0xff]
      %v311 = vld [vmem:[%s277 + $0x18] sm:$0xff]
      %v312 = vld [vmem:[%s277 + $0x20] sm:$0xff]
      %v313 = vld [vmem:[%s277 + $0x28] sm:$0xff]
      %v314 = vld [vmem:[%s277 + $0x30] sm:$0xff]
      %v315 = vld [vmem:[%s277 + $0x38] sm:$0xff]
      %v316 = vld [vmem:[%s277 + $0x40] sm:$0xff]
      %v317 = vld [vmem:[%s277 + $0x48] sm:$0xff]
      %v318 = vld [vmem:[%s277 + $0x50] sm:$0xff]
      %v319 = vld [vmem:[%s277 + $0x58] sm:$0xff]
      %v320 = vld [vmem:[%s277 + $0x60] sm:$0xff]
      %v321 = vld [vmem:[%s277 + $0x68] sm:$0xff]
      %v322 = vld [vmem:[%s277 + $0x70] sm:$0xff]
      %v323 = vld [vmem:[%s277 + $0x78] sm:$0xff]
      %v324 = vld [vmem:[%s277 + $0x80] sm:$0xff]
      %v325 = vld [vmem:[%s277 + $0x88] sm:$0xff]
      %v326 = vld [vmem:[%s277 + $0x90] sm:$0xff]
      %v327 = vld [vmem:[%s277 + $0x98] sm:$0xff]
      %v328 = vld [vmem:[%s277 + $0xa0] sm:$0xff]
      %v329 = vld [vmem:[%s277 + $0xa8] sm:$0xff]
      %v330 = vld [vmem:[%s277 + $0xb0] sm:$0xff]
      %v331 = vld [vmem:[%s277 + $0xb8] sm:$0xff]
      %v332 = vld [vmem:[%s277 + $0xc0] sm:$0xff]
      %v333 = vld [vmem:[%s277 + $0xc8] sm:$0xff]
      %v334 = vld [vmem:[%s277 + $0xd0] sm:$0xff]
      %v335 = vld [vmem:[%s277 + $0xd8] sm:$0xff]
      %v336 = vld [vmem:[%s277 + $0xe0] sm:$0xff]
      %v337 = vld [vmem:[%s277 + $0xe8] sm:$0xff]
      %v338 = vld [vmem:[%s277 + $0xf0] sm:$0xff]
      %v339 = vld [vmem:[%s277 + $0xf8] sm:$0xff]
      %v340 = vmul.f32 %v308, %v308
      %v341 = vmul.f32 %v309, %v309
      %v342 = vmul.f32 %v310, %v310
      %v343 = vmul.f32 %v311, %v311
      %v344 = vmul.f32 %v312, %v312
      %v345 = vmul.f32 %v313, %v313
      %v346 = vmul.f32 %v314, %v314
      %v347 = vmul.f32 %v315, %v315
      %v348 = vmul.f32 %v316, %v316
      %v349 = vmul.f32 %v317, %v317
      %v350 = vmul.f32 %v318, %v318
      %v351 = vmul.f32 %v319, %v319
      %v352 = vmul.f32 %v320, %v320
      %v353 = vmul.f32 %v321, %v321
      %v354 = vmul.f32 %v322, %v322
      %v355 = vmul.f32 %v323, %v323
      %v356 = vmul.f32 %v324, %v324
      %v357 = vmul.f32 %v325, %v325
      %v358 = vmul.f32 %v326, %v326
      %v359 = vmul.f32 %v327, %v327
      %v360 = vmul.f32 %v328, %v328
      %v361 = vmul.f32 %v329, %v329
      %v362 = vmul.f32 %v330, %v330
      %v363 = vmul.f32 %v331, %v331
      %v364 = vmul.f32 %v332, %v332
      %v365 = vmul.f32 %v333, %v333
      %v366 = vmul.f32 %v334, %v334
      %v367 = vmul.f32 %v335, %v335
      %v368 = vmul.f32 %v336, %v336
      %v369 = vmul.f32 %v337, %v337
      %v370 = vmul.f32 %v338, %v338
      %v371 = vmul.f32 %v339, %v339
      %v372 = vadd.f32 %v340, %v341
      %373 = vadd.xlane.f32.xlu0 %v372
      %v374 = vpop.xlane.xlu0 %373
      %v375 = vadd.f32 %v342, %v343
      %376 = vadd.xlane.f32.xlu0 %v375
      %v377 = vpop.xlane.xlu0 %376
      %v378 = vadd.f32 %v344, %v345
      %379 = vadd.xlane.f32.xlu0 %v378
      %v380 = vpop.xlane.xlu0 %379
      %v381 = vadd.f32 %v346, %v347
      %382 = vadd.xlane.f32.xlu0 %v381
      %v383 = vpop.xlane.xlu0 %382
      %v384 = vadd.f32 %v348, %v349
      %385 = vadd.xlane.f32.xlu0 %v384
      %v386 = vpop.xlane.xlu0 %385
      %v387 = vadd.f32 %v350, %v351
      %388 = vadd.xlane.f32.xlu0 %v387
      %v389 = vpop.xlane.xlu0 %388
      %v390 = vadd.f32 %v352, %v353
      %391 = vadd.xlane.f32.xlu0 %v390
      %v392 = vpop.xlane.xlu0 %391
      %v393 = vadd.f32 %v354, %v355
      %394 = vadd.xlane.f32.xlu0 %v393
      %v395 = vpop.xlane.xlu0 %394
      %v396 = vadd.f32 %v356, %v357
      %397 = vadd.xlane.f32.xlu0 %v396
      %v398 = vpop.xlane.xlu0 %397
      %v399 = vadd.f32 %v358, %v359
      %400 = vadd.xlane.f32.xlu0 %v399
      %v401 = vpop.xlane.xlu0 %400
      %v402 = vadd.f32 %v360, %v361
      %403 = vadd.xlane.f32.xlu0 %v402
      %v404 = vpop.xlane.xlu0 %403
      %v405 = vadd.f32 %v362, %v363
      %406 = vadd.xlane.f32.xlu0 %v405
      %v407 = vpop.xlane.xlu0 %406
      %v408 = vadd.f32 %v364, %v365
      %409 = vadd.xlane.f32.xlu0 %v408
      %v410 = vpop.xlane.xlu0 %409
      %v411 = vadd.f32 %v366, %v367
      %412 = vadd.xlane.f32.xlu0 %v411
      %v413 = vpop.xlane.xlu0 %412
      %v414 = vadd.f32 %v368, %v369
      %415 = vadd.xlane.f32.xlu0 %v414
      %v416 = vpop.xlane.xlu0 %415
      %v417 = vadd.f32 %v370, %v371
      %418 = vadd.xlane.f32.xlu0 %v417
      %v419 = vpop.xlane.xlu0 %418
      %v420 = vmul.f32 %v374, 0.00390625
      %v421 = vmul.f32 %v377, 0.00390625
      %v422 = vmul.f32 %v380, 0.00390625
      %v423 = vmul.f32 %v383, 0.00390625
      %v424 = vmul.f32 %v386, 0.00390625
      %v425 = vmul.f32 %v389, 0.00390625
      %v426 = vmul.f32 %v392, 0.00390625
      %v427 = vmul.f32 %v395, 0.00390625
      %v428 = vmul.f32 %v398, 0.00390625
      %v429 = vmul.f32 %v401, 0.00390625
      %v430 = vmul.f32 %v404, 0.00390625
      %v431 = vmul.f32 %v407, 0.00390625
      %v432 = vmul.f32 %v410, 0.00390625
      %v433 = vmul.f32 %v413, 0.00390625
      %v434 = vmul.f32 %v416, 0.00390625
      %v435 = vmul.f32 %v419, 0.00390625
      %v436 = vld [vmem:[%s283] sm:$0xff]
      %v437 = vld [vmem:[%s283 + $0x8] sm:$0xff]
      %v438 = vld [vmem:[%s283 + $0x10] sm:$0xff]
      %v439 = vld [vmem:[%s283 + $0x18] sm:$0xff]
      %v440 = vld [vmem:[%s283 + $0x20] sm:$0xff]
      %v441 = vld [vmem:[%s283 + $0x28] sm:$0xff]
      %v442 = vld [vmem:[%s283 + $0x30] sm:$0xff]
      %v443 = vld [vmem:[%s283 + $0x38] sm:$0xff]
      %v444 = vld [vmem:[%s283 + $0x40] sm:$0xff]
      %v445 = vld [vmem:[%s283 + $0x48] sm:$0xff]
      %v446 = vld [vmem:[%s283 + $0x50] sm:$0xff]
      %v447 = vld [vmem:[%s283 + $0x58] sm:$0xff]
      %v448 = vld [vmem:[%s283 + $0x60] sm:$0xff]
      %v449 = vld [vmem:[%s283 + $0x68] sm:$0xff]
      %v450 = vld [vmem:[%s283 + $0x70] sm:$0xff]
      %v451 = vld [vmem:[%s283 + $0x78] sm:$0xff]
      %v452 = vadd.f32 %v420, 1e-05
      %v453 = vadd.f32 %v421, 1e-05
      %v454 = vadd.f32 %v422, 1e-05
      %v455 = vadd.f32 %v423, 1e-05
      %v456 = vadd.f32 %v424, 1e-05
      %v457 = vadd.f32 %v425, 1e-05
      %v458 = vadd.f32 %v426, 1e-05
      %v459 = vadd.f32 %v427, 1e-05
      %v460 = vadd.f32 %v428, 1e-05
      %v461 = vadd.f32 %v429, 1e-05
      %v462 = vadd.f32 %v430, 1e-05
      %v463 = vadd.f32 %v431, 1e-05
      %v464 = vadd.f32 %v432, 1e-05
      %v465 = vadd.f32 %v433, 1e-05
      %v466 = vadd.f32 %v434, 1e-05
      %v467 = vadd.f32 %v435, 1e-05
      %v468 = vrsqrt.pop %v452
      %v469 = vmul.f32 %v468, %v452
      %v470 = vmul.f32 %v469, %v468
      %v471 = vmul.f32 0.5, %v470
      %v472 = vsub.f32 1.5, %v471
      %v473 = vmul.f32 %v468, %v472
      %vm474 = vweird.f32 %v452
      %vm475 = vweird.f32 %v468
      %vm476 = vmor %vm474, %vm475
      %v477 = vsel %vm476, %v468, %v473
      %v478 = vrsqrt.pop %v453
      %v479 = vmul.f32 %v478, %v453
      %v480 = vmul.f32 %v479, %v478
      %v481 = vmul.f32 0.5, %v480
      %v482 = vsub.f32 1.5, %v481
      %v483 = vmul.f32 %v478, %v482
      %vm484 = vweird.f32 %v453
      %vm485 = vweird.f32 %v478
      %vm486 = vmor %vm484, %vm485
      %v487 = vsel %vm486, %v478, %v483
      %v488 = vrsqrt.pop %v454
      %v489 = vmul.f32 %v488, %v454
      %v490 = vmul.f32 %v489, %v488
      %v491 = vmul.f32 0.5, %v490
      %v492 = vsub.f32 1.5, %v491
      %v493 = vmul.f32 %v488, %v492
      %vm494 = vweird.f32 %v454
      %vm495 = vweird.f32 %v488
      %vm496 = vmor %vm494, %vm495
      %v497 = vsel %vm496, %v488, %v493
      %v498 = vrsqrt.pop %v455
      %v499 = vmul.f32 %v498, %v455
      %v500 = vmul.f32 %v499, %v498
      %v501 = vmul.f32 0.5, %v500
      %v502 = vsub.f32 1.5, %v501
      %v503 = vmul.f32 %v498, %v502
      %vm504 = vweird.f32 %v455
      %vm505 = vweird.f32 %v498
      %vm506 = vmor %vm504, %vm505
      %v507 = vsel %vm506, %v498, %v503
      %v508 = vrsqrt.pop %v456
      %v509 = vmul.f32 %v508, %v456
      %v510 = vmul.f32 %v509, %v508
      %v511 = vmul.f32 0.5, %v510
      %v512 = vsub.f32 1.5, %v511
      %v513 = vmul.f32 %v508, %v512
      %vm514 = vweird.f32 %v456
      %vm515 = vweird.f32 %v508
      %vm516 = vmor %vm514, %vm515
      %v517 = vsel %vm516, %v508, %v513
      %v518 = vrsqrt.pop %v457
      %v519 = vmul.f32 %v518, %v457
      %v520 = vmul.f32 %v519, %v518
      %v521 = vmul.f32 0.5, %v520
      %v522 = vsub.f32 1.5, %v521
      %v523 = vmul.f32 %v518, %v522
      %vm524 = vweird.f32 %v457
      %vm525 = vweird.f32 %v518
      %vm526 = vmor %vm524, %vm525
      %v527 = vsel %vm526, %v518, %v523
      %v528 = vrsqrt.pop %v458
      %v529 = vmul.f32 %v528, %v458
      %v530 = vmul.f32 %v529, %v528
      %v531 = vmul.f32 0.5, %v530
      %v532 = vsub.f32 1.5, %v531
      %v533 = vmul.f32 %v528, %v532
      %vm534 = vweird.f32 %v458
      %vm535 = vweird.f32 %v528
      %vm536 = vmor %vm534, %vm535
      %v537 = vsel %vm536, %v528, %v533
      %v538 = vrsqrt.pop %v459
      %v539 = vmul.f32 %v538, %v459
      %v540 = vmul.f32 %v539, %v538
      %v541 = vmul.f32 0.5, %v540
      %v542 = vsub.f32 1.5, %v541
      %v543 = vmul.f32 %v538, %v542
      %vm544 = vweird.f32 %v459
      %vm545 = vweird.f32 %v538
      %vm546 = vmor %vm544, %vm545
      %v547 = vsel %vm546, %v538, %v543
      %v548 = vrsqrt.pop %v460
      %v549 = vmul.f32 %v548, %v460
      %v550 = vmul.f32 %v549, %v548
      %v551 = vmul.f32 0.5, %v550
      %v552 = vsub.f32 1.5, %v551
      %v553 = vmul.f32 %v548, %v552
      %vm554 = vweird.f32 %v460
      %vm555 = vweird.f32 %v548
      %vm556 = vmor %vm554, %vm555
      %v557 = vsel %vm556, %v548, %v553
      %v558 = vrsqrt.pop %v461
      %v559 = vmul.f32 %v558, %v461
      %v560 = vmul.f32 %v559, %v558
      %v561 = vmul.f32 0.5, %v560
      %v562 = vsub.f32 1.5, %v561
      %v563 = vmul.f32 %v558, %v562
      %vm564 = vweird.f32 %v461
      %vm565 = vweird.f32 %v558
      %vm566 = vmor %vm564, %vm565
      %v567 = vsel %vm566, %v558, %v563
      %v568 = vrsqrt.pop %v462
      %v569 = vmul.f32 %v568, %v462
      %v570 = vmul.f32 %v569, %v568
      %v571 = vmul.f32 0.5, %v570
      %v572 = vsub.f32 1.5, %v571
      %v573 = vmul.f32 %v568, %v572
      %vm574 = vweird.f32 %v462
      %vm575 = vweird.f32 %v568
      %vm576 = vmor %vm574, %vm575
      %v577 = vsel %vm576, %v568, %v573
      %v578 = vrsqrt.pop %v463
      %v579 = vmul.f32 %v578, %v463
      %v580 = vmul.f32 %v579, %v578
      %v581 = vmul.f32 0.5, %v580
      %v582 = vsub.f32 1.5, %v581
      %v583 = vmul.f32 %v578, %v582
      %vm584 = vweird.f32 %v463
      %vm585 = vweird.f32 %v578
      %vm586 = vmor %vm584, %vm585
      %v587 = vsel %vm586, %v578, %v583
      %v588 = vrsqrt.pop %v464
      %v589 = vmul.f32 %v588, %v464
      %v590 = vmul.f32 %v589, %v588
      %v591 = vmul.f32 0.5, %v590
      %v592 = vsub.f32 1.5, %v591
      %v593 = vmul.f32 %v588, %v592
      %vm594 = vweird.f32 %v464
      %vm595 = vweird.f32 %v588
      %vm596 = vmor %vm594, %vm595
      %v597 = vsel %vm596, %v588, %v593
      %v598 = vrsqrt.pop %v465
      %v599 = vmul.f32 %v598, %v465
      %v600 = vmul.f32 %v599, %v598
      %v601 = vmul.f32 0.5, %v600
      %v602 = vsub.f32 1.5, %v601
      %v603 = vmul.f32 %v598, %v602
      %vm604 = vweird.f32 %v465
      %vm605 = vweird.f32 %v598
      %vm606 = vmor %vm604, %vm605
      %v607 = vsel %vm606, %v598, %v603
      %v608 = vrsqrt.pop %v466
      %v609 = vmul.f32 %v608, %v466
      %v610 = vmul.f32 %v609, %v608
      %v611 = vmul.f32 0.5, %v610
      %v612 = vsub.f32 1.5, %v611
      %v613 = vmul.f32 %v608, %v612
      %vm614 = vweird.f32 %v466
      %vm615 = vweird.f32 %v608
      %vm616 = vmor %vm614, %vm615
      %v617 = vsel %vm616, %v608, %v613
      %v618 = vrsqrt.pop %v467
      %v619 = vmul.f32 %v618, %v467
      %v620 = vmul.f32 %v619, %v618
      %v621 = vmul.f32 0.5, %v620
      %v622 = vsub.f32 1.5, %v621
      %v623 = vmul.f32 %v618, %v622
      %vm624 = vweird.f32 %v467
      %vm625 = vweird.f32 %v618
      %vm626 = vmor %vm624, %vm625
      %v627 = vsel %vm626, %v618, %v623
      %v628 = vmul.f32 %v436, %v477
      %v629 = vmul.f32 %v437, %v487
      %v630 = vmul.f32 %v438, %v497
      %v631 = vmul.f32 %v439, %v507
      %v632 = vmul.f32 %v440, %v517
      %v633 = vmul.f32 %v441, %v527
      %v634 = vmul.f32 %v442, %v537
      %v635 = vmul.f32 %v443, %v547
      %v636 = vmul.f32 %v444, %v557
      %v637 = vmul.f32 %v445, %v567
      %v638 = vmul.f32 %v446, %v577
      %v639 = vmul.f32 %v447, %v587
      %v640 = vmul.f32 %v448, %v597
      %v641 = vmul.f32 %v449, %v607
      %v642 = vmul.f32 %v450, %v617
      %v643 = vmul.f32 %v451, %v627
      %645 = vset.pattern.permute.xlu0 0
      %646 = vperm.xlu0 %645, %v628
      %v647 = vpop.permute.xlu0 %646
      %650 = vset.pattern.permute.xlu0 0
      %651 = vperm.xlu0 %650, %v629
      %v652 = vpop.permute.xlu0 %651
      %655 = vset.pattern.permute.xlu0 0
      %656 = vperm.xlu0 %655, %v630
      %v657 = vpop.permute.xlu0 %656
      %660 = vset.pattern.permute.xlu0 0
      %661 = vperm.xlu0 %660, %v631
      %v662 = vpop.permute.xlu0 %661
      %665 = vset.pattern.permute.xlu0 0
      %666 = vperm.xlu0 %665, %v632
      %v667 = vpop.permute.xlu0 %666
      %670 = vset.pattern.permute.xlu0 0
      %671 = vperm.xlu0 %670, %v633
      %v672 = vpop.permute.xlu0 %671
      %675 = vset.pattern.permute.xlu0 0
      %676 = vperm.xlu0 %675, %v634
      %v677 = vpop.permute.xlu0 %676
      %680 = vset.pattern.permute.xlu0 0
      %681 = vperm.xlu0 %680, %v635
      %v682 = vpop.permute.xlu0 %681
      %685 = vset.pattern.permute.xlu0 0
      %686 = vperm.xlu0 %685, %v636
      %v687 = vpop.permute.xlu0 %686
      %690 = vset.pattern.permute.xlu0 0
      %691 = vperm.xlu0 %690, %v637
      %v692 = vpop.permute.xlu0 %691
      %695 = vset.pattern.permute.xlu0 0
      %696 = vperm.xlu0 %695, %v638
      %v697 = vpop.permute.xlu0 %696
      %700 = vset.pattern.permute.xlu0 0
      %701 = vperm.xlu0 %700, %v639
      %v702 = vpop.permute.xlu0 %701
      %705 = vset.pattern.permute.xlu0 0
      %706 = vperm.xlu0 %705, %v640
      %v707 = vpop.permute.xlu0 %706
      %710 = vset.pattern.permute.xlu0 0
      %711 = vperm.xlu0 %710, %v641
      %v712 = vpop.permute.xlu0 %711
      %715 = vset.pattern.permute.xlu0 0
      %716 = vperm.xlu0 %715, %v642
      %v717 = vpop.permute.xlu0 %716
      %720 = vset.pattern.permute.xlu0 0
      %721 = vperm.xlu0 %720, %v643
      %v722 = vpop.permute.xlu0 %721
      %v724 = vmul.f32 %v308, %v647
      %v725 = vmul.f32 %v309, %v647
      %v726 = vmul.f32 %v310, %v652
      %v727 = vmul.f32 %v311, %v652
      %v728 = vmul.f32 %v312, %v657
      %v729 = vmul.f32 %v313, %v657
      %v730 = vmul.f32 %v314, %v662
      %v731 = vmul.f32 %v315, %v662
      %v732 = vmul.f32 %v316, %v667
      %v733 = vmul.f32 %v317, %v667
      %v734 = vmul.f32 %v318, %v672
      %v735 = vmul.f32 %v319, %v672
      %v736 = vmul.f32 %v320, %v677
      %v737 = vmul.f32 %v321, %v677
      %v738 = vmul.f32 %v322, %v682
      %v739 = vmul.f32 %v323, %v682
      %v740 = vmul.f32 %v324, %v687
      %v741 = vmul.f32 %v325, %v687
      %v742 = vmul.f32 %v326, %v692
      %v743 = vmul.f32 %v327, %v692
      %v744 = vmul.f32 %v328, %v697
      %v745 = vmul.f32 %v329, %v697
      %v746 = vmul.f32 %v330, %v702
      %v747 = vmul.f32 %v331, %v702
      %v748 = vmul.f32 %v332, %v707
      %v749 = vmul.f32 %v333, %v707
      %v750 = vmul.f32 %v334, %v712
      %v751 = vmul.f32 %v335, %v712
      %v752 = vmul.f32 %v336, %v717
      %v753 = vmul.f32 %v337, %v717
      %v754 = vmul.f32 %v338, %v722
      %v755 = vmul.f32 %v339, %v722
      %v756 = vld [vmem:[%s289] sm:$0xff]
      %v757 = vld [vmem:[%s289 + $0x8] sm:$0xff]
      %v758 = vld [vmem:[%s289 + $0x10] sm:$0xff]
      %v759 = vld [vmem:[%s289 + $0x18] sm:$0xff]
      %v760 = vld [vmem:[%s289 + $0x20] sm:$0xff]
      %v761 = vld [vmem:[%s289 + $0x28] sm:$0xff]
      %v762 = vld [vmem:[%s289 + $0x30] sm:$0xff]
      %v763 = vld [vmem:[%s289 + $0x38] sm:$0xff]
      %v764 = vld [vmem:[%s289 + $0x40] sm:$0xff]
      %v765 = vld [vmem:[%s289 + $0x48] sm:$0xff]
      %v766 = vld [vmem:[%s289 + $0x50] sm:$0xff]
      %v767 = vld [vmem:[%s289 + $0x58] sm:$0xff]
      %v768 = vld [vmem:[%s289 + $0x60] sm:$0xff]
      %v769 = vld [vmem:[%s289 + $0x68] sm:$0xff]
      %v770 = vld [vmem:[%s289 + $0x70] sm:$0xff]
      %v771 = vld [vmem:[%s289 + $0x78] sm:$0xff]
      %773 = vset.pattern.permute.xlu0 0
      %774 = vperm.xlu0 %773, %v756
      %v775 = vpop.permute.xlu0 %774
      %778 = vset.pattern.permute.xlu0 0
      %779 = vperm.xlu0 %778, %v757
      %v780 = vpop.permute.xlu0 %779
      %783 = vset.pattern.permute.xlu0 0
      %784 = vperm.xlu0 %783, %v758
      %v785 = vpop.permute.xlu0 %784
      %788 = vset.pattern.permute.xlu0 0
      %789 = vperm.xlu0 %788, %v759
      %v790 = vpop.permute.xlu0 %789
      %793 = vset.pattern.permute.xlu0 0
      %794 = vperm.xlu0 %793, %v760
      %v795 = vpop.permute.xlu0 %794
      %798 = vset.pattern.permute.xlu0 0
      %799 = vperm.xlu0 %798, %v761
      %v800 = vpop.permute.xlu0 %799
      %803 = vset.pattern.permute.xlu0 0
      %804 = vperm.xlu0 %803, %v762
      %v805 = vpop.permute.xlu0 %804
      %808 = vset.pattern.permute.xlu0 0
      %809 = vperm.xlu0 %808, %v763
      %v810 = vpop.permute.xlu0 %809
      %813 = vset.pattern.permute.xlu0 0
      %814 = vperm.xlu0 %813, %v764
      %v815 = vpop.permute.xlu0 %814
      %818 = vset.pattern.permute.xlu0 0
      %819 = vperm.xlu0 %818, %v765
      %v820 = vpop.permute.xlu0 %819
      %823 = vset.pattern.permute.xlu0 0
      %824 = vperm.xlu0 %823, %v766
      %v825 = vpop.permute.xlu0 %824
      %828 = vset.pattern.permute.xlu0 0
      %829 = vperm.xlu0 %828, %v767
      %v830 = vpop.permute.xlu0 %829
      %833 = vset.pattern.permute.xlu0 0
      %834 = vperm.xlu0 %833, %v768
      %v835 = vpop.permute.xlu0 %834
      %838 = vset.pattern.permute.xlu0 0
      %839 = vperm.xlu0 %838, %v769
      %v840 = vpop.permute.xlu0 %839
      %843 = vset.pattern.permute.xlu0 0
      %844 = vperm.xlu0 %843, %v770
      %v845 = vpop.permute.xlu0 %844
      %848 = vset.pattern.permute.xlu0 0
      %849 = vperm.xlu0 %848, %v771
      %v850 = vpop.permute.xlu0 %849
      %v852 = vadd.f32 %v724, %v775
      %v853 = vadd.f32 %v725, %v775
      %v854 = vadd.f32 %v726, %v780
      %v855 = vadd.f32 %v727, %v780
      %v856 = vadd.f32 %v728, %v785
      %v857 = vadd.f32 %v729, %v785
      %v858 = vadd.f32 %v730, %v790
      %v859 = vadd.f32 %v731, %v790
      %v860 = vadd.f32 %v732, %v795
      %v861 = vadd.f32 %v733, %v795
      %v862 = vadd.f32 %v734, %v800
      %v863 = vadd.f32 %v735, %v800
      %v864 = vadd.f32 %v736, %v805
      %v865 = vadd.f32 %v737, %v805
      %v866 = vadd.f32 %v738, %v810
      %v867 = vadd.f32 %v739, %v810
      %v868 = vadd.f32 %v740, %v815
      %v869 = vadd.f32 %v741, %v815
      %v870 = vadd.f32 %v742, %v820
      %v871 = vadd.f32 %v743, %v820
      %v872 = vadd.f32 %v744, %v825
      %v873 = vadd.f32 %v745, %v825
      %v874 = vadd.f32 %v746, %v830
      %v875 = vadd.f32 %v747, %v830
      %v876 = vadd.f32 %v748, %v835
      %v877 = vadd.f32 %v749, %v835
      %v878 = vadd.f32 %v750, %v840
      %v879 = vadd.f32 %v751, %v840
      %v880 = vadd.f32 %v752, %v845
      %v881 = vadd.f32 %v753, %v845
      %v882 = vadd.f32 %v754, %v850
      %v883 = vadd.f32 %v755, %v850
      %v884 = vld [vmem:[%s295] sm:$0xff]
      %v885 = vld [vmem:[%s295 + $0x8] sm:$0xff]
      %v886 = vld [vmem:[%s295 + $0x10] sm:$0xff]
      %v887 = vld [vmem:[%s295 + $0x18] sm:$0xff]
      %v888 = vld [vmem:[%s295 + $0x20] sm:$0xff]
      %v889 = vld [vmem:[%s295 + $0x28] sm:$0xff]
      %v890 = vld [vmem:[%s295 + $0x30] sm:$0xff]
      %v891 = vld [vmem:[%s295 + $0x38] sm:$0xff]
      %v892 = vld [vmem:[%s295 + $0x40] sm:$0xff]
      %v893 = vld [vmem:[%s295 + $0x48] sm:$0xff]
      %v894 = vld [vmem:[%s295 + $0x50] sm:$0xff]
      %v895 = vld [vmem:[%s295 + $0x58] sm:$0xff]
      %v896 = vld [vmem:[%s295 + $0x60] sm:$0xff]
      %v897 = vld [vmem:[%s295 + $0x68] sm:$0xff]
      %v898 = vld [vmem:[%s295 + $0x70] sm:$0xff]
      %v899 = vld [vmem:[%s295 + $0x78] sm:$0xff]
      %901 = vset.pattern.permute.xlu0 0
      %902 = vperm.xlu0 %901, %v884
      %v903 = vpop.permute.xlu0 %902
      %906 = vset.pattern.permute.xlu0 0
      %907 = vperm.xlu0 %906, %v885
      %v908 = vpop.permute.xlu0 %907
      %911 = vset.pattern.permute.xlu0 0
      %912 = vperm.xlu0 %911, %v886
      %v913 = vpop.permute.xlu0 %912
      %916 = vset.pattern.permute.xlu0 0
      %917 = vperm.xlu0 %916, %v887
      %v918 = vpop.permute.xlu0 %917
      %921 = vset.pattern.permute.xlu0 0
      %922 = vperm.xlu0 %921, %v888
      %v923 = vpop.permute.xlu0 %922
      %926 = vset.pattern.permute.xlu0 0
      %927 = vperm.xlu0 %926, %v889
      %v928 = vpop.permute.xlu0 %927
      %931 = vset.pattern.permute.xlu0 0
      %932 = vperm.xlu0 %931, %v890
      %v933 = vpop.permute.xlu0 %932
      %936 = vset.pattern.permute.xlu0 0
      %937 = vperm.xlu0 %936, %v891
      %v938 = vpop.permute.xlu0 %937
      %941 = vset.pattern.permute.xlu0 0
      %942 = vperm.xlu0 %941, %v892
      %v943 = vpop.permute.xlu0 %942
      %946 = vset.pattern.permute.xlu0 0
      %947 = vperm.xlu0 %946, %v893
      %v948 = vpop.permute.xlu0 %947
      %951 = vset.pattern.permute.xlu0 0
      %952 = vperm.xlu0 %951, %v894
      %v953 = vpop.permute.xlu0 %952
      %956 = vset.pattern.permute.xlu0 0
      %957 = vperm.xlu0 %956, %v895
      %v958 = vpop.permute.xlu0 %957
      %961 = vset.pattern.permute.xlu0 0
      %962 = vperm.xlu0 %961, %v896
      %v963 = vpop.permute.xlu0 %962
      %966 = vset.pattern.permute.xlu0 0
      %967 = vperm.xlu0 %966, %v897
      %v968 = vpop.permute.xlu0 %967
      %971 = vset.pattern.permute.xlu0 0
      %972 = vperm.xlu0 %971, %v898
      %v973 = vpop.permute.xlu0 %972
      %976 = vset.pattern.permute.xlu0 0
      %977 = vperm.xlu0 %976, %v899
      %v978 = vpop.permute.xlu0 %977
      %v980 = vmax.f32 %v852, %v903
      %v981 = vmax.f32 %v853, %v903
      %v982 = vmax.f32 %v854, %v908
      %v983 = vmax.f32 %v855, %v908
      %v984 = vmax.f32 %v856, %v913
      %v985 = vmax.f32 %v857, %v913
      %v986 = vmax.f32 %v858, %v918
      %v987 = vmax.f32 %v859, %v918
      %v988 = vmax.f32 %v860, %v923
      %v989 = vmax.f32 %v861, %v923
      %v990 = vmax.f32 %v862, %v928
      %v991 = vmax.f32 %v863, %v928
      %v992 = vmax.f32 %v864, %v933
      %v993 = vmax.f32 %v865, %v933
      %v994 = vmax.f32 %v866, %v938
      %v995 = vmax.f32 %v867, %v938
      %v996 = vmax.f32 %v868, %v943
      %v997 = vmax.f32 %v869, %v943
      %v998 = vmax.f32 %v870, %v948
      %v999 = vmax.f32 %v871, %v948
      %v1000 = vmax.f32 %v872, %v953
      %v1001 = vmax.f32 %v873, %v953
      %v1002 = vmax.f32 %v874, %v958
      %v1003 = vmax.f32 %v875, %v958
      %v1004 = vmax.f32 %v876, %v963
      %v1005 = vmax.f32 %v877, %v963
      %v1006 = vmax.f32 %v878, %v968
      %v1007 = vmax.f32 %v879, %v968
      %v1008 = vmax.f32 %v880, %v973
      %v1009 = vmax.f32 %v881, %v973
      %v1010 = vmax.f32 %v882, %v978
      %v1011 = vmax.f32 %v883, %v978
      %1012 = vst [vmem:[%s306] sm:$0xff] %v980
      %1013 = vst [vmem:[%s306 + $0x8] sm:$0xff] %v981
      %1014 = vst [vmem:[%s306 + $0x10] sm:$0xff] %v982
      %1015 = vst [vmem:[%s306 + $0x18] sm:$0xff] %v983
      %1016 = vst [vmem:[%s306 + $0x20] sm:$0xff] %v984
      %1017 = vst [vmem:[%s306 + $0x28] sm:$0xff] %v985
      %1018 = vst [vmem:[%s306 + $0x30] sm:$0xff] %v986
      %1019 = vst [vmem:[%s306 + $0x38] sm:$0xff] %v987
      %1020 = vst [vmem:[%s306 + $0x40] sm:$0xff] %v988
      %1021 = vst [vmem:[%s306 + $0x48] sm:$0xff] %v989
      %1022 = vst [vmem:[%s306 + $0x50] sm:$0xff] %v990
      %1023 = vst [vmem:[%s306 + $0x58] sm:$0xff] %v991
      %1024 = vst [vmem:[%s306 + $0x60] sm:$0xff] %v992
      %1025 = vst [vmem:[%s306 + $0x68] sm:$0xff] %v993
      %1026 = vst [vmem:[%s306 + $0x70] sm:$0xff] %v994
      %1027 = vst [vmem:[%s306 + $0x78] sm:$0xff] %v995
      %1028 = vst [vmem:[%s306 + $0x80] sm:$0xff] %v996
      %1029 = vst [vmem:[%s306 + $0x88] sm:$0xff] %v997
      %1030 = vst [vmem:[%s306 + $0x90] sm:$0xff] %v998
      %1031 = vst [vmem:[%s306 + $0x98] sm:$0xff] %v999
      %1032 = vst [vmem:[%s306 + $0xa0] sm:$0xff] %v1000
      %1033 = vst [vmem:[%s306 + $0xa8] sm:$0xff] %v1001
      %1034 = vst [vmem:[%s306 + $0xb0] sm:$0xff] %v1002
      %1035 = vst [vmem:[%s306 + $0xb8] sm:$0xff] %v1003
      %1036 = vst [vmem:[%s306 + $0xc0] sm:$0xff] %v1004
      %1037 = vst [vmem:[%s306 + $0xc8] sm:$0xff] %v1005
      %1038 = vst [vmem:[%s306 + $0xd0] sm:$0xff] %v1006
      %1039 = vst [vmem:[%s306 + $0xd8] sm:$0xff] %v1007
      %1040 = vst [vmem:[%s306 + $0xe0] sm:$0xff] %v1008
      %1041 = vst [vmem:[%s306 + $0xe8] sm:$0xff] %v1009
      %1042 = vst [vmem:[%s306 + $0xf0] sm:$0xff] %v1010
      %1043 = vst [vmem:[%s306 + $0xf8] sm:$0xff] %v1011
      %s1044 = smul.u32 16, %s20
      %p1045 = scmp.lt.s32.totalorder %s19, 1
      %s1046 = scalar_select %p1045, %s19, 1
      %p1047 = scmp.lt.s32.totalorder %s1044, 15
      %s1048 = scalar_select %p1047, %s1044, 15
      %s1049 = smul.addr %s1048, 2
      %s1050 = smul.addr %s1046, 32
      %s1051 = sadd.s32 %s1049, %s1050
      %s1052 = smul.addr %s1051, 8
      %s1053 = scalar_lea.vmem %s4, %s1052
      // Predicated region
      $region37: #{frn_forward.1} parent=35 // pred_check
        %p1054 = pneg %p153
      $region38: #{frn_forward.1} parent=35 // pred_check_branch
        %1056 = sbr.rel (%p1054) target = $region40
      $region39: #{frn_forward.1} parent=35 // pred_region
        %s1057 = smul.u32 16, %s20
      $region40: #{frn_forward.1} parent=35 // pred_fallthru
        _
    $region36: #{frn_forward.1} parent=5 // pred_fallthru
      _
    %p1058 = scmp.le.s32.totalorder 2, %s10
    // Predicated region
    $region41: #{frn_forward.1} parent=5 // pred_check
      %p1059 = pneg %p1058
    $region42: #{frn_forward.1} parent=5 // pred_check_branch
      %1061 = sbr.rel (%p1059) target = $region44
    $region43: #{frn_forward.1} parent=5 // pred_region
      %s1062 = ssub.s32 %s10, 2
      // Predicated region
      $region45: #{frn_forward.1} parent=43 // pred_check
        %p1063 = pneg %p159
      $region46: #{frn_forward.1} parent=43 // pred_check_branch
        %1065 = sbr.rel (%p1063) target = $region48
      $region47: #{frn_forward.1} parent=43 // pred_region
        %s1066 = smul.u32 16, %s22
        %p1067 = scmp.lt.s32.totalorder %s21, 1
        %s1068 = scalar_select %p1067, %s21, 1
        %p1069 = scmp.lt.s32.totalorder %s1066, 15
        %s1070 = scalar_select %p1069, %s1066, 15
        %s1071 = smul.addr %s1070, 2
        %s1072 = smul.addr %s1068, 32
        %s1073 = sadd.s32 %s1071, %s1072
        %s1074 = smul.addr %s1073, 8
        %s1075 = scalar_lea.vmem %s4, %s1074
      $region48: #{frn_forward.1} parent=43 // pred_fallthru
        _
    $region44: #{frn_forward.1} parent=5 // pred_fallthru
      _
  $region6: #{frn_forward.1} parent=0 // loop_footer
    %s14 = sadd.s32 1, %s10
  $region7: #{frn_forward.1} parent=0 // loop_footer_branch
    %9 = sbr.rel target = $region3
  $region8: #{frn_forward.1} parent=0 // loop_exit
    _

</llo_original>
